<compile_context>
chip_gen: v6e
topology: v6e:2x2x1
jax: 0.10.0
libtpu: 0.0.40
codegen_flags: <defaults>
</compile_context>

<pallas_src>
import jax
import jax.numpy as jnp
from jax import lax
from jax.experimental import pallas as pl
from jax.experimental.pallas import tpu as pltpu


def netvlad_kernel(x_ref, w_ref, cent_ref, out_ref, acc_ref, asum_ref):
    """Processes one (C, tS) spatial tile of one batch element.

    x_ref   : (1, C, tS)  features, channels on sublanes, spatial on lanes
    w_ref   : (K, C)      1x1 conv weight (no bias)
    cent_ref: (K, C)      cluster centroids
    out_ref : (1, K, C)   fully normalized VLAD (written on the last tile)
    acc_ref : (K, C) f32  running  sum_s a[k, s] * x[c, s]
    asum_ref: (K, 1) f32  running  sum_s a[k, s]
    """
    s_idx = pl.program_id(1)
    last_s = pl.num_programs(1) - 1

    @pl.when(s_idx == 0)
    def _init():
        acc_ref[...] = jnp.zeros_like(acc_ref)
        asum_ref[...] = jnp.zeros_like(asum_ref)

    # bf16 MXU operands, f32 accumulation.
    x = x_ref[0].astype(jnp.bfloat16)        # (C, tS)
    w = w_ref[...].astype(jnp.bfloat16)      # (K, C)

    # 1x1 conv: logits[k, s] = sum_c w[k, c] * x[c, s]   (canonical "n-n" matmul)
    logits = lax.dot_general(w, x, (((1,), (0,)), ((), ())),
                             preferred_element_type=jnp.float32)   # (K, tS)

    # softmax over the cluster axis (sublane axis 0) == PyTorch softmax(dim=1)
    m = jnp.max(logits, axis=0, keepdims=True)
    e = jnp.exp(logits - m)
    denom = jnp.sum(e, axis=0, keepdims=True)
    a = e * pl.reciprocal(denom, approx=True)                       # (K, tS) f32
    # TODO(synk): optional `crm` spatial mask not implemented (crm=None path only)

    asum_ref[...] += jnp.sum(a, axis=1, keepdims=True)              # (K, 1)

    # partial vlad: sum_s a[k, s] * x[c, s]   ("n-t" matmul, no a.T materialized)
    acc_ref[...] += lax.dot_general(a.astype(jnp.bfloat16), x,
                                    (((1,), (1,)), ((), ())),
                                    preferred_element_type=jnp.float32)  # (K, C)

    @pl.when(s_idx == last_s)
    def _finalize():
        cent = cent_ref[...].astype(jnp.float32)                    # (K, C)
        vlad = acc_ref[...] - cent * asum_ref[...]
        # intra-normalization: L2 over the descriptor dim (F.normalize eps=1e-12)
        row_ss = jnp.sum(vlad * vlad, axis=1, keepdims=True)
        vlad = vlad * lax.rsqrt(jnp.maximum(row_ss, 1e-24))
        # global L2 normalization over the flattened (K*C) vector
        g_ss = jnp.sum(vlad * vlad)
        vlad = vlad * lax.rsqrt(jnp.maximum(g_ss, 1e-24))
        out_ref[0] = vlad.astype(out_ref.dtype)


def _pick_s_tile(S, C, itemsize, max_tile_bytes=2 * 1024 * 1024):
    """Largest multiple-of-128 divisor of S whose (C, tS) tile fits the budget.

    Keeping the per-step x tile <= ~2 MiB leaves double-buffering headroom on
    all generations (v5e 16 MiB scoped default, v7x 64 MiB physical VMEM).
    """
    if S % 128 != 0:
        return S   # single full-S block (small / odd spatial sizes)
    best = 128
    for t in range(128, S + 1, 128):
        if S % t == 0 and t * C * itemsize <= max_tile_bytes:
            best = t
    return best


def netvlad_forward(x_nchw, conv_weight, centroids, *, s_tile=None):
    """x_nchw: (N, C, H, W); conv_weight: (K, C, 1, 1); centroids: (K, C)."""
    N, C, H, W = x_nchw.shape
    K = conv_weight.shape[0]
    S = H * W

    # Free reshapes only (contiguous-dim collapses) -- no host transpose of x.
    x_ncs = x_nchw.reshape(N, C, S)
    w_kc = conv_weight.reshape(K, C)

    if s_tile is None:
        s_tile = _pick_s_tile(S, C, x_ncs.dtype.itemsize)
    assert S % s_tile == 0, "s_tile must divide H*W"
    assert s_tile == S or s_tile % 128 == 0, \
        "partial spatial tiles must be multiples of 128"
    num_s = S // s_tile
    # (Further tweak for tiny per-element workloads: block several batch
    #  elements per grid step to amortize the ~0.35us/step overhead.)

    vlad = pl.pallas_call(
        netvlad_kernel,
        out_shape=jax.ShapeDtypeStruct((N, K, C), x_nchw.dtype),
        grid_spec=pltpu.PrefetchScalarGridSpec(
            num_scalar_prefetch=0,
            grid=(N, num_s),                        # batch parallel, spatial reduction
            in_specs=[
                pl.BlockSpec((1, C, s_tile), lambda n, s: (n, 0, s)),
                pl.BlockSpec((K, C), lambda n, s: (0, 0)),
                pl.BlockSpec((K, C), lambda n, s: (0, 0)),
            ],
            out_specs=pl.BlockSpec((1, K, C), lambda n, s: (n, 0, 0)),
            scratch_shapes=[
                pltpu.VMEM((K, C), jnp.float32),    # vlad accumulator
                pltpu.VMEM((K, 1), jnp.float32),    # sum_s a[k, s]
            ],
        ),
        compiler_params=pltpu.CompilerParams(
            dimension_semantics=("parallel", "arbitrary"),
            vmem_limit_bytes=64 * 1024 * 1024,      # explicit budget (v5e default: 16 MiB)
        ),
    )(x_ncs, w_kc, centroids)

    # Contiguous collapse -> free view (output is <3% of the HBM traffic).
    return vlad.reshape(N, K * C)


def netvlad_reference(x, conv_w, cent):
    """Pure-JAX reference mirroring the PyTorch forward (crm=None)."""
    N, C, H, W = x.shape
    K = conv_w.shape[0]
    S = H * W
    sa = jnp.einsum('nchw,kc->nkhw', x, conv_w.reshape(K, C)).reshape(N, K, S)
    sa = jax.nn.softmax(sa, axis=1)
    xf = x.reshape(N, C, S)
    vlad = jnp.einsum('nks,ncs->nkc', sa, xf) - cent[None] * sa.sum(-1)[..., None]
    vlad = vlad / jnp.maximum(
        jnp.linalg.norm(vlad, axis=2, keepdims=True), 1e-12)
    vlad = vlad.reshape(N, K * C)
    vlad = vlad / jnp.maximum(
        jnp.linalg.norm(vlad, axis=1, keepdims=True), 1e-12)
    return vlad


if __name__ == "__main__":
    # small, deterministic synthetic config: dim=16, num_clusters=8, 16x16 spatial
    N, C, H, W, K = 2, 16, 16, 16, 8
    key = jax.random.PRNGKey(0)
    kx, kw, kc = jax.random.split(key, 3)

    x = jax.random.normal(kx, (N, C, H, W), dtype=jnp.float32)
    # nn.Conv2d(dim, num_clusters, 1, bias=False) weight: (K, C, 1, 1)
    conv_w = 0.1 * jax.random.normal(kw, (K, C, 1, 1), dtype=jnp.float32)
    # torch.rand(num_clusters, dim) -> uniform [0, 1)
    centroids = jax.random.uniform(kc, (K, C), dtype=jnp.float32)

    ref = netvlad_reference(x, conv_w, centroids)

    # default path (auto spatial tile) and forced multi-tile accumulation path
    out = jax.block_until_ready(netvlad_forward(x, conv_w, centroids))
    out_tiled = jax.block_until_ready(
        netvlad_forward(x, conv_w, centroids, s_tile=128))

    assert out.shape == (N, K * C)
    # bf16 MXU operands + EUP approx reciprocal/rsqrt -> relaxed tolerance vs f32 ref
    assert jnp.allclose(out, ref, atol=2e-2, rtol=2e-2), "mismatch vs reference"
    assert jnp.allclose(out_tiled, ref, atol=2e-2, rtol=2e-2), "tiled mismatch vs reference"
    assert jnp.allclose(out, out_tiled, atol=5e-3, rtol=5e-3), "tiling changed result"

    print("KERNEL_OK")
</pallas_src>

<mosaic_0001>
module attributes {stable_mosaic.version = 11 : i64} {
  func.func @netvlad_kernel(%arg0: i32, %arg1: i32, %arg2: memref<1x16x256xf32, #tpu.memory_space<vmem>>, %arg3: memref<8x16xf32, #tpu.memory_space<vmem>>, %arg4: memref<8x16xf32, #tpu.memory_space<vmem>>, %arg5: memref<1x8x16xf32, #tpu.memory_space<vmem>>, %arg6: memref<8x16xf32, #tpu.memory_space<vmem>>, %arg7: memref<8x1xf32, #tpu.memory_space<vmem>>) attributes {dimension_semantics = [#tpu.dimension_semantics<parallel>, #tpu.dimension_semantics<arbitrary>], iteration_bounds = array<i64: 2, 1>, scalar_prefetch = 0 : i64, scratch_operands = 2 : i64, tpu.core_type = #tpu.core_type<tc>, window_params = [{transform_indices = @transform_0, window_bounds = array<i64: 1, 16, 256>}, {pipeline_mode = #tpu.pipeline_mode<synchronous>, transform_indices = @transform_1, window_bounds = array<i64: 8, 16>}, {pipeline_mode = #tpu.pipeline_mode<synchronous>, transform_indices = @transform_2, window_bounds = array<i64: 8, 16>}, {transform_indices = @transform_3, window_bounds = array<i64: 1, 8, 16>}]} {
    %c0_i32 = arith.constant 0 : i32
    %0 = arith.cmpi eq, %arg1, %c0_i32 : i32
    %1 = arith.extui %0 : i1 to i32
    %c0_i32_0 = arith.constant 0 : i32
    %2 = arith.cmpi ne, %1, %c0_i32_0 : i32
    scf.if %2 {
      %cst_19 = arith.constant 0.000000e+00 : f32
      %32 = vector.broadcast %cst_19 : f32 to vector<8x16xf32>
      %c0_20 = arith.constant 0 : index
      %c0_21 = arith.constant 0 : index
      %33 = vector.load %arg6[%c0_20, %c0_21] : memref<8x16xf32, #tpu.memory_space<vmem>>, vector<8x16xf32>
      tpu.vector_store %arg6[%c0_20, %c0_21], %32 {strides = array<i32>} : memref<8x16xf32, #tpu.memory_space<vmem>>, vector<8x16xf32>,
      %cst_22 = arith.constant 0.000000e+00 : f32
      %34 = vector.broadcast %cst_22 : f32 to vector<8x1xf32>
      %c0_23 = arith.constant 0 : index
      %c0_24 = arith.constant 0 : index
      %35 = vector.load %arg7[%c0_23, %c0_24] : memref<8x1xf32, #tpu.memory_space<vmem>>, vector<8x1xf32>
      tpu.vector_store %arg7[%c0_23, %c0_24], %34 {strides = array<i32>} : memref<8x1xf32, #tpu.memory_space<vmem>>, vector<8x1xf32>,
    } else {
    }
    %c0 = arith.constant 0 : index
    %c0_1 = arith.constant 0 : index
    %c0_2 = arith.constant 0 : index
    %3 = vector.load %arg2[%c0, %c0_1, %c0_2] : memref<1x16x256xf32, #tpu.memory_space<vmem>>, vector<1x16x256xf32>
    %4 = vector.shape_cast %3 : vector<1x16x256xf32> to vector<16x256xf32>
    %5 = arith.truncf %4 : vector<16x256xf32> to vector<16x256xbf16>
    %c0_3 = arith.constant 0 : index
    %c0_4 = arith.constant 0 : index
    %6 = vector.load %arg3[%c0_3, %c0_4] : memref<8x16xf32, #tpu.memory_space<vmem>>, vector<8x16xf32>
    %7 = arith.truncf %6 : vector<8x16xf32> to vector<8x16xbf16>
    %cst = arith.constant dense<0.000000e+00> : vector<8x256xf32>
    %8 = tpu.matmul %7, %5, %cst {dimension_numbers = #tpu.dot_dimension_numbers<[1], [0], [0], [1], [0, 0, 1, 1], [], []>} : vector<8x16xbf16>, vector<16x256xbf16>, vector<8x256xf32> -> vector<8x256xf32>
    %cst_5 = arith.constant dense<0xFF800000> : vector<256xf32>
    %9 = vector.multi_reduction <maximumf>, %8, %cst_5 [0] : vector<8x256xf32> to vector<256xf32>
    %10 = vector.shape_cast %9 : vector<256xf32> to vector<1x256xf32>
    %11 = vector.broadcast %10 : vector<1x256xf32> to vector<8x256xf32>
    %12 = arith.subf %8, %11 : vector<8x256xf32>
    %13 = math.exp %12 : vector<8x256xf32>
    %cst_6 = arith.constant dense<0.000000e+00> : vector<256xf32>
    %14 = vector.multi_reduction <add>, %13, %cst_6 [0] : vector<8x256xf32> to vector<256xf32>
    %15 = vector.shape_cast %14 : vector<256xf32> to vector<1x256xf32>
    %16 = tpu.reciprocal %15 {approx = true} : vector<1x256xf32> -> vector<1x256xf32>
    %17 = vector.broadcast %16 : vector<1x256xf32> to vector<8x256xf32>
    %18 = arith.mulf %13, %17 : vector<8x256xf32>
    %c0_7 = arith.constant 0 : index
    %c0_8 = arith.constant 0 : index
    %19 = vector.load %arg7[%c0_7, %c0_8] : memref<8x1xf32, #tpu.memory_space<vmem>>, vector<8x1xf32>
    %cst_9 = arith.constant dense<0.000000e+00> : vector<8xf32>
    %20 = vector.multi_reduction <add>, %18, %cst_9 [1] : vector<8x256xf32> to vector<8xf32>
    %21 = vector.shape_cast %20 : vector<8xf32> to vector<8x1xf32>
    %22 = arith.addf %19, %21 : vector<8x1xf32>
    %c0_10 = arith.constant 0 : index
    %c0_11 = arith.constant 0 : index
    %23 = vector.load %arg7[%c0_10, %c0_11] : memref<8x1xf32, #tpu.memory_space<vmem>>, vector<8x1xf32>
    tpu.vector_store %arg7[%c0_10, %c0_11], %22 {strides = array<i32>} : memref<8x1xf32, #tpu.memory_space<vmem>>, vector<8x1xf32>,
    %c0_12 = arith.constant 0 : index
    %c0_13 = arith.constant 0 : index
    %24 = vector.load %arg6[%c0_12, %c0_13] : memref<8x16xf32, #tpu.memory_space<vmem>>, vector<8x16xf32>
    %25 = arith.truncf %18 : vector<8x256xf32> to vector<8x256xbf16>
    %cst_14 = arith.constant dense<0.000000e+00> : vector<8x16xf32>
    %26 = tpu.matmul %25, %5, %cst_14 {dimension_numbers = #tpu.dot_dimension_numbers<[1], [1], [0], [0], [0, 0, 1, 0], [], []>} : vector<8x256xbf16>, vector<16x256xbf16>, vector<8x16xf32> -> vector<8x16xf32>
    %27 = arith.addf %24, %26 : vector<8x16xf32>
    %c0_15 = arith.constant 0 : index
    %c0_16 = arith.constant 0 : index
    %28 = vector.load %arg6[%c0_15, %c0_16] : memref<8x16xf32, #tpu.memory_space<vmem>>, vector<8x16xf32>
    tpu.vector_store %arg6[%c0_15, %c0_16], %27 {strides = array<i32>} : memref<8x16xf32, #tpu.memory_space<vmem>>, vector<8x16xf32>,
    %c0_i32_17 = arith.constant 0 : i32
    %29 = arith.cmpi eq, %arg1, %c0_i32_17 : i32
    %30 = arith.extui %29 : i1 to i32
    %c0_i32_18 = arith.constant 0 : i32
    %31 = arith.cmpi ne, %30, %c0_i32_18 : i32
    scf.if %31 {
      %c0_19 = arith.constant 0 : index
      %c0_20 = arith.constant 0 : index
      %32 = vector.load %arg4[%c0_19, %c0_20] : memref<8x16xf32, #tpu.memory_space<vmem>>, vector<8x16xf32>
      %c0_21 = arith.constant 0 : index
      %c0_22 = arith.constant 0 : index
      %33 = vector.load %arg6[%c0_21, %c0_22] : memref<8x16xf32, #tpu.memory_space<vmem>>, vector<8x16xf32>
      %c0_23 = arith.constant 0 : index
      %c0_24 = arith.constant 0 : index
      %34 = vector.load %arg7[%c0_23, %c0_24] : memref<8x1xf32, #tpu.memory_space<vmem>>, vector<8x1xf32>
      %35 = vector.broadcast %34 : vector<8x1xf32> to vector<8x16xf32>
      %36 = arith.mulf %32, %35 : vector<8x16xf32>
      %37 = arith.subf %33, %36 : vector<8x16xf32>
      %38 = arith.mulf %37, %37 : vector<8x16xf32>
      %cst_25 = arith.constant dense<0.000000e+00> : vector<8xf32>
      %39 = vector.multi_reduction <add>, %38, %cst_25 [1] : vector<8x16xf32> to vector<8xf32>
      %40 = vector.shape_cast %39 : vector<8xf32> to vector<8x1xf32>
      %cst_26 = arith.constant 1.000000e-24 : f32
      %41 = vector.broadcast %cst_26 : f32 to vector<8x1xf32>
      %42 = arith.maximumf %40, %41 : vector<8x1xf32>
      %43 = math.rsqrt %42 : vector<8x1xf32>
      %44 = vector.broadcast %43 : vector<8x1xf32> to vector<8x16xf32>
      %45 = arith.mulf %37, %44 : vector<8x16xf32>
      %46 = arith.mulf %45, %45 : vector<8x16xf32>
      %47 = vector.shape_cast %46 : vector<8x16xf32> to vector<1x8x16xf32>
      %cst_27 = arith.constant dense<0.000000e+00> : vector<1xf32>
      %48 = vector.multi_reduction <add>, %47, %cst_27 [1, 2] : vector<1x8x16xf32> to vector<1xf32>
      %49 = vector.shape_cast %48 : vector<1xf32> to vector<1x1x1xf32>
      %50 = vector.extract %49[0, 0, 0] : f32 from vector<1x1x1xf32>
      %cst_28 = arith.constant 1.000000e-24 : f32
      %51 = arith.maximumf %50, %cst_28 : f32
      %52 = math.rsqrt %51 : f32
      %53 = vector.broadcast %52 : f32 to vector<8x16xf32>
      %54 = arith.mulf %45, %53 : vector<8x16xf32>
      %c0_29 = arith.constant 0 : index
      %c0_30 = arith.constant 0 : index
      %c0_31 = arith.constant 0 : index
      %55 = vector.load %arg5[%c0_29, %c0_30, %c0_31] : memref<1x8x16xf32, #tpu.memory_space<vmem>>, vector<1x8x16xf32>
      %56 = vector.shape_cast %55 : vector<1x8x16xf32> to vector<8x16xf32>
      %57 = vector.shape_cast %54 : vector<8x16xf32> to vector<1x8x16xf32>
      tpu.vector_store %arg5[%c0_29, %c0_30, %c0_31], %57 {strides = array<i32>} : memref<1x8x16xf32, #tpu.memory_space<vmem>>, vector<1x8x16xf32>,
    } else {
    }
    return
  }
  func.func @transform_0(%arg0: i32, %arg1: i32) -> (i32, i32, i32) {
    %c0_i32 = arith.constant 0 : i32
    %c0_i32_0 = arith.constant 0 : i32
    return %arg0, %c0_i32, %arg1 : i32, i32, i32
  }
  func.func @transform_1(%arg0: i32, %arg1: i32) -> (i32, i32) {
    %c0_i32 = arith.constant 0 : i32
    %c0_i32_0 = arith.constant 0 : i32
    %c0_i32_1 = arith.constant 0 : i32
    return %c0_i32, %c0_i32_0 : i32, i32
  }
  func.func @transform_2(%arg0: i32, %arg1: i32) -> (i32, i32) {
    %c0_i32 = arith.constant 0 : i32
    %c0_i32_0 = arith.constant 0 : i32
    %c0_i32_1 = arith.constant 0 : i32
    return %c0_i32, %c0_i32_0 : i32, i32
  }
  func.func @transform_3(%arg0: i32, %arg1: i32) -> (i32, i32, i32) {
    %c0_i32 = arith.constant 0 : i32
    %c0_i32_0 = arith.constant 0 : i32
    %c0_i32_1 = arith.constant 0 : i32
    return %arg0, %c0_i32, %c0_i32_0 : i32, i32, i32
  }
}

</mosaic_0001>

<llo_original>
// kernel: tpu_custom_call.1
$region0: #{tpu_custom_call.1}
  #allocation0 [shape = 'u32[]', space=smem, size = 0x4, offset = 0x4, fixed_abs, tag = 'smem constant byte address 0x4 - core index']
  #allocation1 [shape = 'u32[144,128]{1,0:T(1,128)}', space=vmem, size = 0x12000, scoped, tag = 'internal scratch']
  #allocation2 [shape = 'f32[8,16]{1,0:T(8,128)}', space=vmem, size = 0x1000, scoped, tag = 'scratch operand']
  #allocation3 [shape = 'f32[8,1]{1,0:T(8,128)}', space=vmem, size = 0x1000, scoped, tag = 'scratch operand']
  %s0 = inlined_call_operand.hbm [shape: f32[2,16,256], index: 0, kind: input, shape index: {}]
  %s1 = inlined_call_operand.hbm [shape: f32[8,16], index: 1, kind: input, shape index: {}]
  %s2 = inlined_call_operand.hbm [shape: f32[8,16], index: 2, kind: input, shape index: {}]
  %s3 = inlined_call_operand.hbm [shape: f32[2,8,16], index: 3, kind: output, shape index: {}]
  %s4 = sld [smem:[#allocation0]]
  $region65: #{tpu_custom_call.1} parent=0
    _
  %s6 = ssub.s32 1, %s4
  %s7 = scalar_select 0, %s6, %s4
  $region1: #{tpu_custom_call.1} parent=0
    #allocation4 [shape = 'u8[32768]{0}', space=vmem, size = 0x8000, scoped, tag = 'input window, operand 0']
    #allocation5 [shape = 's32[2]{0}', space=sflag, size = 0x8, scoped, tag = 'scoped memory for tpu_custom_call.1']
    #allocation6 [shape = 's32[2]{0}', space=sflag, size = 0x8, scoped, tag = 'scoped memory for tpu_custom_call.1']
    #allocation7 [shape = 'u8[4096]{0}', space=vmem, size = 0x1000, scoped, tag = 'input window, operand 1, single buffered']
    #allocation8 [shape = 's32[1]{0}', space=sflag, size = 0x4, scoped, tag = 'scoped memory for tpu_custom_call.1']
    #allocation9 [shape = 'u8[4096]{0}', space=vmem, size = 0x1000, scoped, tag = 'input window, operand 2, single buffered']
    #allocation10 [shape = 'u8[8192]{0}', space=vmem, size = 0x2000, scoped, tag = 'output window, operand 0']
    %8 = vsyncpa [#allocation5], 0
    %s9 = scalar_lea.sflag [#allocation5], 1
    %10 = vsyncpa %s9, 0
    %11 = vsyncpa [#allocation8], 0
    %12 = vsyncpa [#allocation6], 0
    %s13 = scalar_lea.sflag [#allocation6], 1
    %14 = vsyncpa %s13, 0
    loop: start=0, step=1, limit=4
    $region2: #{tpu_custom_call.1} parent=1 // loop_pre_header
      _
    $region3: #{tpu_custom_call.1} parent=1 // loop_header
      %s16 = sphi 0, %s20
      %p17 = scmp.ge.s32.totalorder %s16, 4
      %s23 = sphi 0, %s35
      %s24 = sphi 0, %s31
      %s25 = sphi 0, %s23
      %s26 = sphi 0, %s24
      %s27 = sphi 0, %s25
      %s28 = sphi 0, %s26
      %s40 = sphi 0, %s42
      %s43 = sphi 0, %s40
      %s44 = sphi 0, %s43
      %s60 = sphi 0, %s44
      %s64 = sphi 0, %s64
      %s66 = sphi 0, %s64
      %s67 = sphi 0, %s66
      %s81 = sphi 0, %s67
      %s85 = sphi 0, %s85
      %s87 = sphi 0, %s85
      %s88 = sphi 0, %s87
      %s102 = sphi 0, %s88
      %s108 = sphi 0, %s110
      %s111 = sphi 0, %s108
      %s112 = sphi 0, %s111
      %s128 = sphi 0, %s112
    $region4: #{tpu_custom_call.1} parent=1 // loop_header_branch
      %19 = sbr.rel (%p17) target = $region8
    $region5: #{tpu_custom_call.1} parent=1 // loop_body
      %s21 = ssub.s32 %s16, 1
      %s22 = ssub.s32 %s16, 2
      %s29 = sadd.s32 1, %s24
      %p30 = scmp.ge.s32.totalorder %s29, 1
      %s31 = scalar_select %p30, 0, %s29
      %s32 = sadd.s32 1, %s23
      %s33 = scalar_select %p30, %s32, %s23
      %p34 = scmp.ge.s32.totalorder %s33, 2
      %s35 = scalar_select %p34, 0, %s33
      %s36 = ssub.s32 %s23, %s35
      %s37 = ssub.s32 %s24, %s31
      %s38 = sor.u32 %s36, %s37
      %p39 = scmp.eq.s32.totalorder %s38, 0
      %s41 = sadd.s32 %s40, 1
      %s42 = scalar_select %p39, %s40, %s41
      %p45 = pneg %p39
      %p46 = scmp.eq.s32.totalorder %s16, 1
      %p47 = por %p45, %p46
      %p48 = scmp.ne.s32.totalorder %s40, %s43
      %p49 = scmp.eq.s32.totalorder %s16, 0
      %p50 = por %p48, %p49
      %p51 = scmp.ne.s32.totalorder %s40, %s43
      %p52 = scmp.eq.s32.totalorder %s21, 1
      %p53 = por %p51, %p52
      %p54 = scmp.ne.s32.totalorder %s43, %s44
      %p55 = scmp.eq.s32.totalorder %s21, 0
      %p56 = por %p54, %p55
      %p57 = scmp.ne.s32.totalorder %s43, %s44
      %p58 = scmp.eq.s32.totalorder %s22, 1
      %p59 = por %p57, %p58
      %p61 = scmp.ne.s32.totalorder %s44, %s60
      %p62 = scmp.eq.s32.totalorder %s22, 0
      %p63 = por %p61, %p62
      %s65 = sadd.s32 %s64, 1
      %p68 = scmp.eq.s32.totalorder %s16, 1
      %p69 = scmp.ne.s32.totalorder %s64, %s66
      %p70 = scmp.eq.s32.totalorder %s16, 0
      %p71 = por %p69, %p70
      %p72 = scmp.ne.s32.totalorder %s64, %s66
      %p73 = scmp.eq.s32.totalorder %s21, 1
      %p74 = por %p72, %p73
      %p75 = scmp.ne.s32.totalorder %s66, %s67
      %p76 = scmp.eq.s32.totalorder %s21, 0
      %p77 = por %p75, %p76
      %p78 = scmp.ne.s32.totalorder %s66, %s67
      %p79 = scmp.eq.s32.totalorder %s22, 1
      %p80 = por %p78, %p79
      %p82 = scmp.ne.s32.totalorder %s67, %s81
      %p83 = scmp.eq.s32.totalorder %s22, 0
      %p84 = por %p82, %p83
      %s86 = sadd.s32 %s85, 1
      %p89 = scmp.eq.s32.totalorder %s16, 1
      %p90 = scmp.ne.s32.totalorder %s85, %s87
      %p91 = scmp.eq.s32.totalorder %s16, 0
      %p92 = por %p90, %p91
      %p93 = scmp.ne.s32.totalorder %s85, %s87
      %p94 = scmp.eq.s32.totalorder %s21, 1
      %p95 = por %p93, %p94
      %p96 = scmp.ne.s32.totalorder %s87, %s88
      %p97 = scmp.eq.s32.totalorder %s21, 0
      %p98 = por %p96, %p97
      %p99 = scmp.ne.s32.totalorder %s87, %s88
      %p100 = scmp.eq.s32.totalorder %s22, 1
      %p101 = por %p99, %p100
      %p103 = scmp.ne.s32.totalorder %s88, %s102
      %p104 = scmp.eq.s32.totalorder %s22, 0
      %p105 = por %p103, %p104
      %s106 = ssub.s32 %s23, %s35
      %p107 = scmp.eq.s32.totalorder %s106, 0
      %s109 = sadd.s32 %s108, 1
      %s110 = scalar_select %p107, %s108, %s109
      %p113 = pneg %p107
      %p114 = scmp.eq.s32.totalorder %s16, 1
      %p115 = por %p113, %p114
      %p116 = scmp.ne.s32.totalorder %s108, %s111
      %p117 = scmp.eq.s32.totalorder %s16, 0
      %p118 = por %p116, %p117
      %p119 = scmp.ne.s32.totalorder %s108, %s111
      %p120 = scmp.eq.s32.totalorder %s21, 1
      %p121 = por %p119, %p120
      %p122 = scmp.ne.s32.totalorder %s111, %s112
      %p123 = scmp.eq.s32.totalorder %s21, 0
      %p124 = por %p122, %p123
      %p125 = scmp.ne.s32.totalorder %s111, %s112
      %p126 = scmp.eq.s32.totalorder %s22, 1
      %p127 = por %p125, %p126
      %p129 = scmp.ne.s32.totalorder %s112, %s128
      %p130 = scmp.eq.s32.totalorder %s22, 0
      %p131 = por %p129, %p130
      %p132 = scmp.le.s32.totalorder 1, %s16
      %p133 = scmp.lt.s32.totalorder %s16, 3
      %p134 = pnand %p132, %p133
      %p135 = pneg %p134
      // Predicated region
      $region9: #{tpu_custom_call.1} parent=5 // pred_check
        _
      $region10: #{tpu_custom_call.1} parent=5 // pred_check_branch
        %137 = sbr.rel (%p134) target = $region12
      $region11: #{tpu_custom_call.1} parent=5 // pred_region
        %s138 = ssub.s32 %s16, 1
        // Predicated region
        $region13: #{tpu_custom_call.1} parent=11 // pred_check
          %p139 = pneg %p77
        $region14: #{tpu_custom_call.1} parent=11 // pred_check_branch
          %141 = sbr.rel (%p139) target = $region16
        $region15: #{tpu_custom_call.1} parent=11 // pred_region
          %s143 = ssub.s32 128, 128
          %144 = vsyncadd [#allocation8], %s143
          %s146 = sshll.u32 [#allocation7], 4
          %s147 = int_to_ptr.vmem [resolvable:$true] %s146
          %149 = dma.hbm_to_vmem [thread:$0]  %s1, 128, %s147, [#allocation8]
        $region16: #{tpu_custom_call.1} parent=11 // pred_fallthru
          _
        // Predicated region
        $region17: #{tpu_custom_call.1} parent=11 // pred_check
          %p150 = pneg %p98
        $region18: #{tpu_custom_call.1} parent=11 // pred_check_branch
          %152 = sbr.rel (%p150) target = $region20
        $region19: #{tpu_custom_call.1} parent=11 // pred_region
          %s154 = ssub.s32 128, 128
          %155 = vsyncadd [#allocation8], %s154
          %s157 = sshll.u32 [#allocation9], 4
          %s158 = int_to_ptr.vmem [resolvable:$true] %s157
          %160 = dma.hbm_to_vmem [thread:$0]  %s2, 128, %s158, [#allocation8]
        $region20: #{tpu_custom_call.1} parent=11 // pred_fallthru
          _
      $region12: #{tpu_custom_call.1} parent=5 // pred_fallthru
        _
      %p161 = scmp.lt.s32.totalorder %s16, 2
      // Predicated region
      $region21: #{tpu_custom_call.1} parent=5 // pred_check
        %p162 = pneg %p161
      $region22: #{tpu_custom_call.1} parent=5 // pred_check_branch
        %164 = sbr.rel (%p162) target = $region24
      $region23: #{tpu_custom_call.1} parent=5 // pred_region
        // Predicated region
        $region25: #{tpu_custom_call.1} parent=23 // pred_check
          %p165 = pneg %p50
        $region26: #{tpu_custom_call.1} parent=23 // pred_check_branch
          %167 = sbr.rel (%p165) target = $region28
        $region27: #{tpu_custom_call.1} parent=23 // pred_region
          %s168 = sand.u32 %s40, 1
          %s169 = scalar_lea.sflag [#allocation5], %s168
          %s170 = sand.u32 %s40, 1
          %s171 = smul.addr %s170, 32
          %s172 = scalar_lea.vmem [#allocation4], %s171
          %s173 = smul.u32 2, %s24
          %s175 = ssub.s32 512, 512
          %176 = vsyncadd %s169, %s175
          %s177 = smul.addr %s23, 4
          %s178 = sadd.s32 %s173, %s177
          %s179 = smul.addr %s178, 128
          %s180 = scalar_lea.hbm %s0, %s179
          %s181 = sshll.u32 %s172, 4
          %s182 = int_to_ptr.vmem [resolvable:$true] %s181
          %187 = dma.hbm_to_vmem [thread:$0]  %s180, 512, %s182, %s169, 256, 256, 16
        $region28: #{tpu_custom_call.1} parent=23 // pred_fallthru
          _
      $region24: #{tpu_custom_call.1} parent=5 // pred_fallthru
        _
      %p188 = scmp.le.s32.totalorder 1, %s16
      %p189 = scmp.lt.s32.totalorder %s16, 3
      %p190 = pnand %p188, %p189
      %p191 = pneg %p190
      // Predicated region
      $region29: #{tpu_custom_call.1} parent=5 // pred_check
        _
      $region30: #{tpu_custom_call.1} parent=5 // pred_check_branch
        %193 = sbr.rel (%p190) target = $region32
      $region31: #{tpu_custom_call.1} parent=5 // pred_region
        %s194 = ssub.s32 %s16, 1
        %s195 = sand.u32 %s43, 1
        %s196 = scalar_lea.sflag [#allocation5], %s195
        %s197 = sand.u32 %s43, 1
        %s198 = smul.addr %s197, 32
        %s199 = scalar_lea.vmem [#allocation4], %s198
        // Predicated region
        $region33: #{tpu_custom_call.1} parent=31 // pred_check
          %p200 = pneg %p56
        $region34: #{tpu_custom_call.1} parent=31 // pred_check_branch
          %202 = sbr.rel (%p200) target = $region36
        $region35: #{tpu_custom_call.1} parent=31 // pred_region
          %203 = dma.done %s196, 512
        $region36: #{tpu_custom_call.1} parent=31 // pred_fallthru
          _
        // Predicated region
        $region37: #{tpu_custom_call.1} parent=31 // pred_check
          %p204 = pneg %p77
        $region38: #{tpu_custom_call.1} parent=31 // pred_check_branch
          %206 = sbr.rel (%p204) target = $region40
        $region39: #{tpu_custom_call.1} parent=31 // pred_region
          %207 = dma.done [#allocation8], 128
        $region40: #{tpu_custom_call.1} parent=31 // pred_fallthru
          _
        // Predicated region
        $region41: #{tpu_custom_call.1} parent=31 // pred_check
          %p208 = pneg %p98
        $region42: #{tpu_custom_call.1} parent=31 // pred_check_branch
          %210 = sbr.rel (%p208) target = $region44
        $region43: #{tpu_custom_call.1} parent=31 // pred_region
          %211 = dma.done [#allocation8], 128
        $region44: #{tpu_custom_call.1} parent=31 // pred_fallthru
          _
        %s212 = sand.u32 %s43, 1
        %s213 = scalar_lea.sflag [#allocation5], %s212
        %s214 = sand.u32 %s43, 1
        %s215 = smul.addr %s214, 32
        %s216 = scalar_lea.vmem [#allocation4], %s215
        %p217 = pneg %p56
        %p218 = pneg %p53
        %p219 = pneg %p77
        %p220 = pneg %p74
        %p221 = pneg %p98
        %p222 = pneg %p95
        %p223 = pneg %p124
        %p224 = pneg %p121
        %s225 = sand.u32 %s111, 1
        %s226 = scalar_lea.sflag [#allocation6], %s225
        %s227 = sand.u32 %s111, 1
        %s228 = smul.addr %s227, 8
        %s229 = scalar_lea.vmem [#allocation10], %s228
        %s230 = smul.u32 2, %s26
        %p232 = scmp.eq.s32.totalorder %s26, 0
        // Predicated region
        $region45: #{tpu_custom_call.1} parent=31 // pred_check
          %p233 = pneg %p232
        $region46: #{tpu_custom_call.1} parent=31 // pred_check_branch
          %235 = sbr.rel (%p233) target = $region48
        $region47: #{tpu_custom_call.1} parent=31 // pred_region
          %vm236 = vcmask 130048
          %237 = vst.msk [vmem:[#allocation2] sm:$0xff] %vm236, 0.0
          %vm238 = vcmask 7168
          %239 = vst.msk [vmem:[#allocation3] sm:$0xff] %vm238, 0.0
        $region48: #{tpu_custom_call.1} parent=31 // pred_fallthru
          _
        %v240 = vld [vmem:[%s199] sm:$0xff]
        %v241 = vld [vmem:[%s199 + $0x8] sm:$0xff]
        %v242 = vld [vmem:[%s199 + $0x10] sm:$0xff]
        %v243 = vld [vmem:[%s199 + $0x18] sm:$0xff]
        %v244 = vpack.c.bf16 %v242, %v240
        %v245 = vpack.c.bf16 %v243, %v241
        %v246 = vld [vmem:[#allocation7] sm:$0xff]
        %v247 = vpack.c.bf16 %v246, %v246
        %vm248 = vcmask 130048
        %v250 = vsel %vm248, %v247, 0
        %252 = vmatprep.subr.bf16.mxu0 0
        %253 = vmatpush1.bf16.msra.mxu0 0
        %254 = vmatprep.subr.bf16.mxu0 0
        %255 = vmatpush1.bf16.msra.mxu0 0
        %256 = vmatprep.subr.bf16.mxu0 0
        %257 = vmatpush1.bf16.msra.mxu0 0
        %258 = vmatprep.subr.bf16.mxu0 0
        %259 = vmatpush1.bf16.msra.mxu0 0
        %260 = vmatprep.subr.bf16.mxu0 0
        %261 = vmatpush1.bf16.msra.mxu0 0
        %262 = vmatprep.subr.bf16.mxu0 0
        %263 = vmatpush1.bf16.msra.mxu0 0
        %264 = vmatprep.subr.bf16.mxu0 0
        %265 = vmatpush1.bf16.msra.mxu0 0
        %266 = vmatprep.subr.bf16.mxu0 %v245
        %267 = vmatpush1.bf16.msra.mxu0 %v244
        %268 = vmatprep.subr.bf16.mxu0 0
        %269 = vmatpush2.bf16.msra.mxu0 0
        %270 = vmatprep.subr.bf16.mxu0 0
        %271 = vmatpush2.bf16.msra.mxu0 0
        %272 = vmatprep.subr.bf16.mxu0 0
        %273 = vmatpush2.bf16.msra.mxu0 0
        %274 = vmatprep.subr.bf16.mxu0 0
        %275 = vmatpush2.bf16.msra.mxu0 0
        %276 = vmatprep.subr.bf16.mxu0 0
        %277 = vmatpush2.bf16.msra.mxu0 0
        %278 = vmatprep.subr.bf16.mxu0 0
        %279 = vmatpush2.bf16.msra.mxu0 0
        %280 = vmatprep.subr.bf16.mxu0 0
        %281 = vmatpush2.bf16.msra.mxu0 0
        %282 = vmatprep.subr.bf16.mxu0 0
        %283 = vmatpush2.bf16.msra.mxu0 0
        %284 = vmatprep.mubr.bf16.mxu0 0
        %285 = vmatmul.mubr.bf16.gmra.mxu0 %v250
        %v286 = vpop.f32.mrf.mxu0
        %v287 = vadd.f32 0.0, %v286
        %v288 = vpop.f32.mrf.mxu0
        %v289 = vadd.f32 0.0, %v288
        %v290 = vpop.f32.mrf.mxu0
        %v291 = vpop.f32.mrf.mxu0
        %292 = vdwg.mxu0
        %v293 = vrot.slane %v287, 4
        %v294 = vmax.f32 %v287, %v293
        %v295 = vrot.slane %v294, 2
        %v296 = vmax.f32 %v294, %v295
        %v297 = vrot.slane %v296, 1
        %v298 = vmax.f32 %v296, %v297
        %v299 = vrot.slane %v289, 4
        %v300 = vmax.f32 %v289, %v299
        %v301 = vrot.slane %v300, 2
        %v302 = vmax.f32 %v300, %v301
        %v303 = vrot.slane %v302, 1
        %v304 = vmax.f32 %v302, %v303
        %v305 = vsub.f32 %v287, %v298
        %v306 = vsub.f32 %v289, %v304
        %v307 = vmul.f32 %v305, 1.442695
        %v308 = vpow.pop %v307
        %v309 = vmul.f32 %v306, 1.442695
        %v310 = vpow.pop %v309
        %v311 = vrot.slane %v308, 4
        %v312 = vadd.f32 %v308, %v311
        %v313 = vrot.slane %v312, 2
        %v314 = vadd.f32 %v312, %v313
        %v315 = vrot.slane %v314, 1
        %v316 = vadd.f32 %v314, %v315
        %v317 = vrot.slane %v310, 4
        %v318 = vadd.f32 %v310, %v317
        %v319 = vrot.slane %v318, 2
        %v320 = vadd.f32 %v318, %v319
        %v321 = vrot.slane %v320, 1
        %v322 = vadd.f32 %v320, %v321
        %v323 = vrcp.pop %v316
        %v324 = vrcp.pop %v322
        %v325 = vmul.f32 %v308, %v323
        %v326 = vmul.f32 %v310, %v324
        %v327 = vld [vmem:[#allocation3] sm:$0xff]
        %v328 = vadd.f32 %v325, %v326
        %329 = vadd.xlane.f32.xlu0 %v328
        %v330 = vpop.xlane.xlu0 %329
        %v331 = vadd.f32 %v327, %v330
        %vm332 = vcmask 7168
        %333 = vst.msk [vmem:[#allocation3] sm:$0xff] %vm332, %v331
        %v334 = vld [vmem:[#allocation2] sm:$0xff]
        %v335 = vpack.c.bf16 %v325, %v325
        %v336 = vpack.c.bf16 %v326, %v326
        %337 = vmatprep.subr.bf16.mxu0 0
        %338 = vmatpush1.bf16.xpose.msra.mxu0 0
        %339 = vmatprep.subr.bf16.mxu0 0
        %340 = vmatpush1.bf16.xpose.msra.mxu0 0
        %341 = vmatprep.subr.bf16.mxu0 0
        %342 = vmatpush1.bf16.xpose.msra.mxu0 0
        %343 = vmatprep.subr.bf16.mxu0 0
        %344 = vmatpush1.bf16.xpose.msra.mxu0 0
        %345 = vmatprep.subr.bf16.mxu0 0
        %346 = vmatpush1.bf16.xpose.msra.mxu0 0
        %347 = vmatprep.subr.bf16.mxu0 0
        %348 = vmatpush1.bf16.xpose.msra.mxu0 0
        %349 = vmatprep.subr.bf16.mxu0 0
        %350 = vmatpush1.bf16.xpose.msra.mxu0 0
        %351 = vmatprep.subr.bf16.mxu0 %v245
        %352 = vmatpush1.bf16.xpose.msra.mxu0 %v244
        %353 = vmatprep.subr.bf16.mxu0 0
        %354 = vmatpush2.bf16.xpose.msra.mxu0 0
        %355 = vmatprep.subr.bf16.mxu0 0
        %356 = vmatpush2.bf16.xpose.msra.mxu0 0
        %357 = vmatprep.subr.bf16.mxu0 0
        %358 = vmatpush2.bf16.xpose.msra.mxu0 0
        %359 = vmatprep.subr.bf16.mxu0 0
        %360 = vmatpush2.bf16.xpose.msra.mxu0 0
        %361 = vmatprep.subr.bf16.mxu0 0
        %362 = vmatpush2.bf16.xpose.msra.mxu0 0
        %363 = vmatprep.subr.bf16.mxu0 0
        %364 = vmatpush2.bf16.xpose.msra.mxu0 0
        %365 = vmatprep.subr.bf16.mxu0 0
        %366 = vmatpush2.bf16.xpose.msra.mxu0 0
        %367 = vmatprep.subr.bf16.mxu0 0
        %368 = vmatpush2.bf16.xpose.msra.mxu0 0
        %369 = vmatprep.mubr.bf16.mxu0 %v336
        %370 = vmatmul.mubr.bf16.gmra.mxu0 %v335
        %v371 = vpop.f32.mrf.mxu0
        %v372 = vadd.f32 0.0, %v371
        %v373 = vpop.f32.mrf.mxu0
        %v374 = vpop.f32.mrf.mxu0
        %v375 = vpop.f32.mrf.mxu0
        %376 = vdwg.mxu0
        %v377 = vadd.f32 %v334, %v372
        %378 = vst.msk [vmem:[#allocation2] sm:$0xff] %vm248, %v377
        // Predicated region
        $region49: #{tpu_custom_call.1} parent=31 // pred_check
          %p379 = pneg %p232
        $region50: #{tpu_custom_call.1} parent=31 // pred_check_branch
          %381 = sbr.rel (%p379) target = $region52
        $region51: #{tpu_custom_call.1} parent=31 // pred_region
          %v382 = vld [vmem:[#allocation9] sm:$0xff]
          %v383 = vld [vmem:[#allocation2] sm:$0xff]
          %v384 = vld [vmem:[#allocation3] sm:$0xff]
          %386 = vset.pattern.permute.xlu0 0
          %387 = vperm.xlu0 %386, %v384
          %v388 = vpop.permute.xlu0 %387
          %v390 = vmul.f32 %v382, %v388
          %v391 = vsub.f32 %v383, %v390
          %v392 = vmul.f32 %v391, %v391
          %v393 = vsel %vm248, %v392, 0.0
          %394 = vadd.xlane.f32.xlu0 %v393
          %v395 = vpop.xlane.xlu0 %394
          %v396 = vmax.f32 %v395, 1e-24
          %v397 = vrsqrt.pop %v396
          %v398 = vmul.f32 %v391, %v397
          %v399 = vmul.f32 %v398, %v398
          %v400 = vsel %vm248, %v399, 0.0
          %401 = vadd.xlane.f32.xlu0 %v400
          %v402 = vpop.xlane.xlu0 %401
          %v403 = vrot.slane %v402, 4
          %v404 = vadd.f32 %v402, %v403
          %v405 = vrot.slane %v404, 2
          %v406 = vadd.f32 %v404, %v405
          %v407 = vrot.slane %v406, 1
          %v408 = vadd.f32 %v406, %v407
          %s409 = vtos %v408
          %s410 = smax.f32 %s409, 1e-24
          %v411 = vstv %s410
          %v412 = vrsqrt.pop %v411
          %s413 = vtos %v412
          %v414 = vstv %s413
          %v415 = vmul.f32 %v398, %v414
          %416 = vst.msk [vmem:[%s229] sm:$0xff] %vm248, %v415
        $region52: #{tpu_custom_call.1} parent=31 // pred_fallthru
          _
        %s417 = sand.u32 %s111, 1
        %s418 = scalar_lea.sflag [#allocation6], %s417
        %s419 = sand.u32 %s111, 1
        %s420 = smul.addr %s419, 8
        %s421 = scalar_lea.vmem [#allocation10], %s420
        // Predicated region
        $region53: #{tpu_custom_call.1} parent=31 // pred_check
          %p422 = pneg %p121
        $region54: #{tpu_custom_call.1} parent=31 // pred_check_branch
          %424 = sbr.rel (%p422) target = $region56
        $region55: #{tpu_custom_call.1} parent=31 // pred_region
          %s426 = ssub.s32 128, 128
          %427 = vsyncadd %s418, %s426
          %s428 = smul.addr %s25, 128
          %s429 = scalar_lea.hbm %s3, %s428
          %s431 = sshll.u32 %s421, 4
          %s432 = int_to_ptr.vmem [resolvable:$true] %s431
          %434 = dma.vmem_to_hbm [thread:$0]  %s432, 128, %s429, %s418
        $region56: #{tpu_custom_call.1} parent=31 // pred_fallthru
          _
      $region32: #{tpu_custom_call.1} parent=5 // pred_fallthru
        _
      %p435 = scmp.le.s32.totalorder 2, %s16
      // Predicated region
      $region57: #{tpu_custom_call.1} parent=5 // pred_check
        %p436 = pneg %p435
      $region58: #{tpu_custom_call.1} parent=5 // pred_check_branch
        %438 = sbr.rel (%p436) target = $region60
      $region59: #{tpu_custom_call.1} parent=5 // pred_region
        %s439 = ssub.s32 %s16, 2
        // Predicated region
        $region61: #{tpu_custom_call.1} parent=59 // pred_check
          %p440 = pneg %p127
        $region62: #{tpu_custom_call.1} parent=59 // pred_check_branch
          %442 = sbr.rel (%p440) target = $region64
        $region63: #{tpu_custom_call.1} parent=59 // pred_region
          %s443 = sand.u32 %s112, 1
          %s444 = scalar_lea.sflag [#allocation6], %s443
          %s445 = sand.u32 %s112, 1
          %s446 = smul.addr %s445, 8
          %s447 = scalar_lea.vmem [#allocation10], %s446
          %448 = dma.done %s444, 128
        $region64: #{tpu_custom_call.1} parent=59 // pred_fallthru
          _
      $region60: #{tpu_custom_call.1} parent=5 // pred_fallthru
        _
    $region6: #{tpu_custom_call.1} parent=1 // loop_footer
      %s20 = sadd.s32 1, %s16
    $region7: #{tpu_custom_call.1} parent=1 // loop_footer_branch
      %15 = sbr.rel target = $region3
    $region8: #{tpu_custom_call.1} parent=1 // loop_exit
      _
    %449 = vsyncpa [#allocation5], 1
    %s450 = scalar_lea.sflag [#allocation5], 1
    %451 = vsyncpa %s450, 1
    %452 = vsyncpa [#allocation8], 1
    %453 = vsyncpa [#allocation6], 1
    %s454 = scalar_lea.sflag [#allocation6], 1
    %455 = vsyncpa %s454, 1

</llo_original>
